<compile_context>
chip_gen: v5e
topology: v5e:2x2
jax: 0.10.0
libtpu: 0.0.40
codegen_flags: <defaults>
</compile_context>

<pallas_src>
import functools

import jax
import jax.numpy as jnp
from jax import lax
from jax.experimental import pallas as pl
from jax.experimental.pallas import tpu as pltpu

NEG_SLOPE = 0.01  # torch.nn.LeakyReLU default negative_slope
MLP_ORDER = ("embx", "emby", "outlayer", "embx2", "emby2", "outlayer2")

_vmem = functools.partial(pl.BlockSpec, memory_space=pltpu.MemorySpace.VMEM)


def _leaky(v):
    return jnp.where(v > 0, v, NEG_SLOPE * v)


# --------------------------------------------------------------------------
# Fused kernel: whole network forward in one pallas_call.
# --------------------------------------------------------------------------
def _gcn_fused_kernel(a_ref, at_ref, xy_ref, ew_ref, eb_ref,
                      lw1_ref, lb1_ref, lw2_ref, lb2_ref,
                      hw1_ref, hb1_ref, hw2_ref, hb2_ref,
                      o_ref, *, n_x, n_updates):
    A = a_ref[...]          # (n_y, n_x)  bf16
    AT = at_ref[...]        # (n_x, n_y)  bf16 (precomputed transpose)

    # Merged top-level embedding: reference applies embx to BOTH x and y; the
    # wrapper row-concatenates them so this is a single MXU push + one bias
    # read instead of two.
    xy = jnp.dot(xy_ref[...], ew_ref[...],
                 preferred_element_type=jnp.float32) + eb_ref[...]
    x = xy[:n_x]            # (n_x, feat) f32
    y = xy[n_x:]            # (n_y, feat) f32

    def mlp(idx, v, add=None):
        # Linear -> LeakyReLU -> Linear; bf16 operands, f32 accumulate,
        # f32 bias/activation math. Bias slabs are (N, feat): idx picks a
        # dense feat-long row (no (1,feat)->(8,128) padding per entry).
        h = jnp.dot(v.astype(jnp.bfloat16), lw1_ref[idx],
                    preferred_element_type=jnp.float32) + lb1_ref[idx]
        h = _leaky(h)
        o = jnp.dot(h.astype(jnp.bfloat16), lw2_ref[idx],
                    preferred_element_type=jnp.float32) + lb2_ref[idx]
        if add is not None:
            o = o + add
        return o

    def layer(l, carry):
        x, y = carry
        base = 6 * l
        # Ax = embx(A @ x)
        Ax = mlp(base + 0, jnp.dot(A, x.astype(jnp.bfloat16),
                                   preferred_element_type=jnp.float32))
        # y = outlayer(emby(y) + Ax)
        y = mlp(base + 1, y, add=Ax)
        y = mlp(base + 2, y)
        # ATy = emby2(A^T @ y)  -- uses precomputed A_T (no per-layer relayout)
        ATy = mlp(base + 4, jnp.dot(AT, y.astype(jnp.bfloat16),
                                    preferred_element_type=jnp.float32))
        # x = outlayer2(embx2(x) + ATy)
        x = mlp(base + 3, x, add=ATy)
        x = mlp(base + 5, x)
        return x, y

    # fori_loop bounds vreg live ranges (vs. full Python unroll).
    x, y = lax.fori_loop(0, n_updates, layer, (x, y))

    # Fused output heads (both read x, matching reference quirk): one
    # (feat, 2*feat) matmul + one block-diagonal (2*feat, 2) matmul, single
    # (n_x, 2) store.
    hh = _leaky(jnp.dot(x.astype(jnp.bfloat16), hw1_ref[...],
                        preferred_element_type=jnp.float32) + hb1_ref[...])
    o_ref[...] = _leaky(jnp.dot(hh.astype(jnp.bfloat16), hw2_ref[...],
                                preferred_element_type=jnp.float32) + hb2_ref[...])


# --------------------------------------------------------------------------
# Parameter construction (deterministic, torch-Linear-like uniform init)
# --------------------------------------------------------------------------
def init_linear(key, in_f, out_f):
    kw, kb = jax.random.split(key)
    bound = 1.0 / (in_f ** 0.5)
    w = jax.random.uniform(kw, (in_f, out_f), jnp.float32, -bound, bound)
    b = jax.random.uniform(kb, (out_f,), jnp.float32, -bound, bound)  # flat bias
    return w, b


def init_mlp2(key, in_f, hid_f, out_f):
    k1, k2 = jax.random.split(key)
    w1, b1 = init_linear(k1, in_f, hid_f)
    w2, b2 = init_linear(k2, hid_f, out_f)
    return (w1, b1, w2, b2)


def init_gcn_layer(key, x_size, y_size, feat):
    keys = jax.random.split(key, 6)
    return {
        "embx": init_mlp2(keys[0], x_size, feat, feat),
        "emby": init_mlp2(keys[1], y_size, feat, feat),
        "outlayer": init_mlp2(keys[2], feat, feat, feat),
        "embx2": init_mlp2(keys[3], x_size, feat, feat),
        "emby2": init_mlp2(keys[4], y_size, feat, feat),
        "outlayer2": init_mlp2(keys[5], feat, feat, feat),
    }


def init_gcn(key, x_size, y_size, feat, n_layer=4):
    n_updates = 1 + n_layer
    keys = jax.random.split(key, 4 + n_updates)
    return {
        "embx": init_linear(keys[0], x_size, feat),
        "emby": init_linear(keys[1], y_size, feat),  # created but unused (matches reference)
        "layers": [
            init_gcn_layer(keys[2 + i], feat, feat, feat) for i in range(n_updates)
        ],
        "outX": init_mlp2(keys[2 + n_updates], feat, feat, 1),
        "outY": init_mlp2(keys[3 + n_updates], feat, feat, 1),
    }


# --------------------------------------------------------------------------
# Forward: pack weights into VMEM-resident slabs, one pallas_call total.
# --------------------------------------------------------------------------
def gcn_forward(params, A, x, y):
    n_updates = len(params["layers"])
    n_x = x.shape[0]
    feat = params["embx"][0].shape[1]
    bf16 = jnp.bfloat16

    ew, eb = params["embx"]
    assert x.shape[1] == ew.shape[0], "embx in-features must match x feature dim"
    # Reference applies embx to y as well; only valid if y_size == x_size.
    assert y.shape[1] == ew.shape[0], "y_size must equal x_size (reference quirk)"

    layers = params["layers"]
    # Weight slabs: bf16 (MXU-native); bias slabs: f32, flattened to (N, feat).
    lw1 = jnp.stack([layers[l][m][0] for l in range(n_updates) for m in MLP_ORDER]).astype(bf16)
    lb1 = jnp.stack([layers[l][m][1] for l in range(n_updates) for m in MLP_ORDER])
    lw2 = jnp.stack([layers[l][m][2] for l in range(n_updates) for m in MLP_ORDER]).astype(bf16)
    lb2 = jnp.stack([layers[l][m][3] for l in range(n_updates) for m in MLP_ORDER])

    # Fused output head: concat W1 along lanes, block-diagonal W2.
    w1X, b1X, w2X, b2X = params["outX"]
    w1Y, b1Y, w2Y, b2Y = params["outY"]
    hw1 = jnp.concatenate([w1X, w1Y], axis=1).astype(bf16)          # (feat, 2*feat)
    hb1 = jnp.concatenate([b1X, b1Y])[None, :]                      # (1, 2*feat) f32
    zpad = jnp.zeros_like(w2X)
    hw2 = jnp.concatenate(
        [jnp.concatenate([w2X, zpad], axis=1),
         jnp.concatenate([zpad, w2Y], axis=1)], axis=0).astype(bf16)  # (2*feat, 2)
    hb2 = jnp.concatenate([b2X, b2Y])[None, :]                      # (1, 2) f32

    # Merged top-level embedding input + precomputed transpose, bf16 operands.
    xy = jnp.concatenate([x, y], axis=0).astype(bf16)               # (n_x+n_y, x_size)
    A_bf = A.astype(bf16)
    AT_bf = A.T.astype(bf16)

    out = pl.pallas_call(
        functools.partial(_gcn_fused_kernel, n_x=n_x, n_updates=n_updates),
        out_shape=jax.ShapeDtypeStruct((n_x, 2), jnp.float32),
        in_specs=[_vmem()] * 13,
        out_specs=_vmem(),
        compiler_params=pltpu.CompilerParams(vmem_limit_bytes=32 * 1024 * 1024),
    )(A_bf, AT_bf, xy, ew.astype(bf16), eb[None, :],
      lw1, lb1, lw2, lb2, hw1, hb1, hw2, hb2)

    return out[:, 0:1], out[:, 1:2]


# --------------------------------------------------------------------------
# Pure-JAX f32 reference for a numerical sanity check
# --------------------------------------------------------------------------
def _ref_mlp2(x, p, add=None, final_act=False):
    w1, b1, w2, b2 = p
    h = _leaky(x @ w1 + b1)
    o = h @ w2 + b2
    if add is not None:
        o = o + add
    if final_act:
        o = _leaky(o)
    return o


def _ref_forward(params, A, x, y):
    x = x @ params["embx"][0] + params["embx"][1]
    y = y @ params["embx"][0] + params["embx"][1]
    for p in params["layers"]:
        Ax = _ref_mlp2(A @ x, p["embx"])
        y = _ref_mlp2(y, p["emby"], add=Ax)
        y = _ref_mlp2(y, p["outlayer"])
        ATy = _ref_mlp2(A.T @ y, p["emby2"])
        x = _ref_mlp2(x, p["embx2"], add=ATy)
        x = _ref_mlp2(x, p["outlayer2"])
    return (_ref_mlp2(x, params["outX"], final_act=True),
            _ref_mlp2(x, params["outY"], final_act=True))


# --------------------------------------------------------------------------
if __name__ == "__main__":
    x_size, y_size, feat = 4, 4, 32
    n_x, n_y = 16, 8
    n_layer = 4

    root = jax.random.PRNGKey(0)
    k_param, k_a, k_x, k_y = jax.random.split(root, 4)

    params = init_gcn(k_param, x_size, y_size, feat, n_layer=n_layer)

    A = jax.random.normal(k_a, (n_y, n_x), jnp.float32)   # adjacency (y-nodes x x-nodes)
    x = jax.random.normal(k_x, (n_x, x_size), jnp.float32)
    y = jax.random.normal(k_y, (n_y, y_size), jnp.float32)

    fwd = jax.jit(gcn_forward)
    out_x, out_y = fwd(params, A, x, y)
    jax.block_until_ready((out_x, out_y))

    ref_x, ref_y = _ref_forward(params, A, x, y)
    assert out_x.shape == (n_x, 1) and out_y.shape == (n_x, 1)
    # Tolerance loosened because matmul operands are bf16 (f32 accumulate).
    assert jnp.allclose(out_x, ref_x, rtol=5e-2, atol=5e-2)
    assert jnp.allclose(out_y, ref_y, rtol=5e-2, atol=5e-2)

    print("KERNEL_OK")
</pallas_src>

<mosaic_0001>
module attributes {stable_mosaic.version = 11 : i64} {
  func.func @_gcn_fused_kernel(%arg0: memref<8x16xbf16, #tpu.memory_space<vmem>>, %arg1: memref<16x8xbf16, #tpu.memory_space<vmem>>, %arg2: memref<24x4xbf16, #tpu.memory_space<vmem>>, %arg3: memref<4x32xbf16, #tpu.memory_space<vmem>>, %arg4: memref<1x32xf32, #tpu.memory_space<vmem>>, %arg5: memref<30x32x32xbf16, #tpu.memory_space<vmem>>, %arg6: memref<30x32xf32, #tpu.memory_space<vmem>>, %arg7: memref<30x32x32xbf16, #tpu.memory_space<vmem>>, %arg8: memref<30x32xf32, #tpu.memory_space<vmem>>, %arg9: memref<32x64xbf16, #tpu.memory_space<vmem>>, %arg10: memref<1x64xf32, #tpu.memory_space<vmem>>, %arg11: memref<64x2xbf16, #tpu.memory_space<vmem>>, %arg12: memref<1x2xf32, #tpu.memory_space<vmem>>, %arg13: memref<16x2xf32, #tpu.memory_space<vmem>>) attributes {dimension_semantics = [], scalar_prefetch = 0 : i64, scratch_operands = 0 : i64, tpu.core_type = #tpu.core_type<tc>} {
    %c0 = arith.constant 0 : index
    %c0_0 = arith.constant 0 : index
    %0 = vector.load %arg0[%c0, %c0_0] : memref<8x16xbf16, #tpu.memory_space<vmem>>, vector<8x16xbf16>
    %c0_1 = arith.constant 0 : index
    %c0_2 = arith.constant 0 : index
    %1 = vector.load %arg1[%c0_1, %c0_2] : memref<16x8xbf16, #tpu.memory_space<vmem>>, vector<16x8xbf16>
    %c0_3 = arith.constant 0 : index
    %c0_4 = arith.constant 0 : index
    %2 = vector.load %arg2[%c0_3, %c0_4] : memref<24x4xbf16, #tpu.memory_space<vmem>>, vector<24x4xbf16>
    %c0_5 = arith.constant 0 : index
    %c0_6 = arith.constant 0 : index
    %3 = vector.load %arg3[%c0_5, %c0_6] : memref<4x32xbf16, #tpu.memory_space<vmem>>, vector<4x32xbf16>
    %cst = arith.constant dense<0.000000e+00> : vector<24x32xf32>
    %4 = tpu.matmul %2, %3, %cst {dimension_numbers = #tpu.dot_dimension_numbers<[1], [0], [0], [1], [0, 0, 1, 1], [], []>} : vector<24x4xbf16>, vector<4x32xbf16>, vector<24x32xf32> -> vector<24x32xf32>
    %c0_7 = arith.constant 0 : index
    %c0_8 = arith.constant 0 : index
    %5 = vector.load %arg4[%c0_7, %c0_8] : memref<1x32xf32, #tpu.memory_space<vmem>>, vector<1x32xf32>
    %6 = vector.broadcast %5 : vector<1x32xf32> to vector<24x32xf32>
    %7 = arith.addf %4, %6 : vector<24x32xf32>
    %8 = vector.extract_strided_slice %7 {offsets = [0, 0], sizes = [16, 32], strides = [1, 1]} : vector<24x32xf32> to vector<16x32xf32>
    %9 = vector.extract_strided_slice %7 {offsets = [16, 0], sizes = [8, 32], strides = [1, 1]} : vector<24x32xf32> to vector<8x32xf32>
    %c0_i32 = arith.constant 0 : i32
    %c5_i32 = arith.constant 5 : i32
    %10 = arith.addi %c0_i32, %c5_i32 : i32
    %c1_i32 = arith.constant 1 : i32
    %11:2 = scf.for %arg14 = %c0_i32 to %10 step %c1_i32 iter_args(%arg15 = %8, %arg16 = %9) -> (vector<16x32xf32>, vector<8x32xf32>)  : i32 {
      %c6_i32 = arith.constant 6 : i32
      %35 = arith.muli %c6_i32, %arg14 : i32
      %c0_i32_26 = arith.constant 0 : i32
      %36 = arith.addi %35, %c0_i32_26 : i32
      %37 = arith.truncf %arg15 : vector<16x32xf32> to vector<16x32xbf16>
      %cst_27 = arith.constant dense<0.000000e+00> : vector<8x32xf32>
      %38 = tpu.matmul %0, %37, %cst_27 {dimension_numbers = #tpu.dot_dimension_numbers<[1], [0], [0], [1], [0, 0, 1, 1], [], []>} : vector<8x16xbf16>, vector<16x32xbf16>, vector<8x32xf32> -> vector<8x32xf32>
      %39 = arith.truncf %38 : vector<8x32xf32> to vector<8x32xbf16>
      %40 = arith.index_cast %36 : i32 to index
      %c0_28 = arith.constant 0 : index
      %c0_29 = arith.constant 0 : index
      %41 = vector.load %arg5[%40, %c0_28, %c0_29] : memref<30x32x32xbf16, #tpu.memory_space<vmem>>, vector<1x32x32xbf16>
      %42 = vector.shape_cast %41 : vector<1x32x32xbf16> to vector<32x32xbf16>
      %cst_30 = arith.constant dense<0.000000e+00> : vector<8x32xf32>
      %43 = tpu.matmul %39, %42, %cst_30 {dimension_numbers = #tpu.dot_dimension_numbers<[1], [0], [0], [1], [0, 0, 1, 1], [], []>} : vector<8x32xbf16>, vector<32x32xbf16>, vector<8x32xf32> -> vector<8x32xf32>
      %44 = arith.index_cast %36 : i32 to index
      %c0_31 = arith.constant 0 : index
      %45 = vector.load %arg6[%44, %c0_31] : memref<30x32xf32, #tpu.memory_space<vmem>>, vector<1x32xf32>
      %46 = vector.shape_cast %45 : vector<1x32xf32> to vector<32xf32>
      %47 = vector.shape_cast %46 : vector<32xf32> to vector<1x32xf32>
      %48 = vector.broadcast %47 : vector<1x32xf32> to vector<8x32xf32>
      %49 = arith.addf %43, %48 : vector<8x32xf32>
      %cst_32 = arith.constant 0.000000e+00 : f32
      %50 = vector.broadcast %cst_32 : f32 to vector<8x32xf32>
      %51 = arith.cmpf ogt, %49, %50 : vector<8x32xf32>
      %cst_33 = arith.constant 0.00999999977 : f32
      %52 = vector.broadcast %cst_33 : f32 to vector<8x32xf32>
      %53 = arith.mulf %52, %49 : vector<8x32xf32>
      %54 = arith.select %51, %49, %53 : vector<8x32xi1>, vector<8x32xf32>
      %55 = arith.truncf %54 : vector<8x32xf32> to vector<8x32xbf16>
      %56 = arith.index_cast %36 : i32 to index
      %c0_34 = arith.constant 0 : index
      %c0_35 = arith.constant 0 : index
      %57 = vector.load %arg7[%56, %c0_34, %c0_35] : memref<30x32x32xbf16, #tpu.memory_space<vmem>>, vector<1x32x32xbf16>
      %58 = vector.shape_cast %57 : vector<1x32x32xbf16> to vector<32x32xbf16>
      %cst_36 = arith.constant dense<0.000000e+00> : vector<8x32xf32>
      %59 = tpu.matmul %55, %58, %cst_36 {dimension_numbers = #tpu.dot_dimension_numbers<[1], [0], [0], [1], [0, 0, 1, 1], [], []>} : vector<8x32xbf16>, vector<32x32xbf16>, vector<8x32xf32> -> vector<8x32xf32>
      %60 = arith.index_cast %36 : i32 to index
      %c0_37 = arith.constant 0 : index
      %61 = vector.load %arg8[%60, %c0_37] : memref<30x32xf32, #tpu.memory_space<vmem>>, vector<1x32xf32>
      %62 = vector.shape_cast %61 : vector<1x32xf32> to vector<32xf32>
      %63 = vector.shape_cast %62 : vector<32xf32> to vector<1x32xf32>
      %64 = vector.broadcast %63 : vector<1x32xf32> to vector<8x32xf32>
      %65 = arith.addf %59, %64 : vector<8x32xf32>
      %c1_i32_38 = arith.constant 1 : i32
      %66 = arith.addi %35, %c1_i32_38 : i32
      %67 = arith.truncf %arg16 : vector<8x32xf32> to vector<8x32xbf16>
      %68 = arith.index_cast %66 : i32 to index
      %c0_39 = arith.constant 0 : index
      %c0_40 = arith.constant 0 : index
      %69 = vector.load %arg5[%68, %c0_39, %c0_40] : memref<30x32x32xbf16, #tpu.memory_space<vmem>>, vector<1x32x32xbf16>
      %70 = vector.shape_cast %69 : vector<1x32x32xbf16> to vector<32x32xbf16>
      %cst_41 = arith.constant dense<0.000000e+00> : vector<8x32xf32>
      %71 = tpu.matmul %67, %70, %cst_41 {dimension_numbers = #tpu.dot_dimension_numbers<[1], [0], [0], [1], [0, 0, 1, 1], [], []>} : vector<8x32xbf16>, vector<32x32xbf16>, vector<8x32xf32> -> vector<8x32xf32>
      %72 = arith.index_cast %66 : i32 to index
      %c0_42 = arith.constant 0 : index
      %73 = vector.load %arg6[%72, %c0_42] : memref<30x32xf32, #tpu.memory_space<vmem>>, vector<1x32xf32>
      %74 = vector.shape_cast %73 : vector<1x32xf32> to vector<32xf32>
      %75 = vector.shape_cast %74 : vector<32xf32> to vector<1x32xf32>
      %76 = vector.broadcast %75 : vector<1x32xf32> to vector<8x32xf32>
      %77 = arith.addf %71, %76 : vector<8x32xf32>
      %cst_43 = arith.constant 0.000000e+00 : f32
      %78 = vector.broadcast %cst_43 : f32 to vector<8x32xf32>
      %79 = arith.cmpf ogt, %77, %78 : vector<8x32xf32>
      %cst_44 = arith.constant 0.00999999977 : f32
      %80 = vector.broadcast %cst_44 : f32 to vector<8x32xf32>
      %81 = arith.mulf %80, %77 : vector<8x32xf32>
      %82 = arith.select %79, %77, %81 : vector<8x32xi1>, vector<8x32xf32>
      %83 = arith.truncf %82 : vector<8x32xf32> to vector<8x32xbf16>
      %84 = arith.index_cast %66 : i32 to index
      %c0_45 = arith.constant 0 : index
      %c0_46 = arith.constant 0 : index
      %85 = vector.load %arg7[%84, %c0_45, %c0_46] : memref<30x32x32xbf16, #tpu.memory_space<vmem>>, vector<1x32x32xbf16>
      %86 = vector.shape_cast %85 : vector<1x32x32xbf16> to vector<32x32xbf16>
      %cst_47 = arith.constant dense<0.000000e+00> : vector<8x32xf32>
      %87 = tpu.matmul %83, %86, %cst_47 {dimension_numbers = #tpu.dot_dimension_numbers<[1], [0], [0], [1], [0, 0, 1, 1], [], []>} : vector<8x32xbf16>, vector<32x32xbf16>, vector<8x32xf32> -> vector<8x32xf32>
      %88 = arith.index_cast %66 : i32 to index
      %c0_48 = arith.constant 0 : index
      %89 = vector.load %arg8[%88, %c0_48] : memref<30x32xf32, #tpu.memory_space<vmem>>, vector<1x32xf32>
      %90 = vector.shape_cast %89 : vector<1x32xf32> to vector<32xf32>
      %91 = vector.shape_cast %90 : vector<32xf32> to vector<1x32xf32>
      %92 = vector.broadcast %91 : vector<1x32xf32> to vector<8x32xf32>
      %93 = arith.addf %87, %92 : vector<8x32xf32>
      %94 = arith.addf %93, %65 : vector<8x32xf32>
      %c2_i32 = arith.constant 2 : i32
      %95 = arith.addi %35, %c2_i32 : i32
      %96 = arith.truncf %94 : vector<8x32xf32> to vector<8x32xbf16>
      %97 = arith.index_cast %95 : i32 to index
      %c0_49 = arith.constant 0 : index
      %c0_50 = arith.constant 0 : index
      %98 = vector.load %arg5[%97, %c0_49, %c0_50] : memref<30x32x32xbf16, #tpu.memory_space<vmem>>, vector<1x32x32xbf16>
      %99 = vector.shape_cast %98 : vector<1x32x32xbf16> to vector<32x32xbf16>
      %cst_51 = arith.constant dense<0.000000e+00> : vector<8x32xf32>
      %100 = tpu.matmul %96, %99, %cst_51 {dimension_numbers = #tpu.dot_dimension_numbers<[1], [0], [0], [1], [0, 0, 1, 1], [], []>} : vector<8x32xbf16>, vector<32x32xbf16>, vector<8x32xf32> -> vector<8x32xf32>
      %101 = arith.index_cast %95 : i32 to index
      %c0_52 = arith.constant 0 : index
      %102 = vector.load %arg6[%101, %c0_52] : memref<30x32xf32, #tpu.memory_space<vmem>>, vector<1x32xf32>
      %103 = vector.shape_cast %102 : vector<1x32xf32> to vector<32xf32>
      %104 = vector.shape_cast %103 : vector<32xf32> to vector<1x32xf32>
      %105 = vector.broadcast %104 : vector<1x32xf32> to vector<8x32xf32>
      %106 = arith.addf %100, %105 : vector<8x32xf32>
      %cst_53 = arith.constant 0.000000e+00 : f32
      %107 = vector.broadcast %cst_53 : f32 to vector<8x32xf32>
      %108 = arith.cmpf ogt, %106, %107 : vector<8x32xf32>
      %cst_54 = arith.constant 0.00999999977 : f32
      %109 = vector.broadcast %cst_54 : f32 to vector<8x32xf32>
      %110 = arith.mulf %109, %106 : vector<8x32xf32>
      %111 = arith.select %108, %106, %110 : vector<8x32xi1>, vector<8x32xf32>
      %112 = arith.truncf %111 : vector<8x32xf32> to vector<8x32xbf16>
      %113 = arith.index_cast %95 : i32 to index
      %c0_55 = arith.constant 0 : index
      %c0_56 = arith.constant 0 : index
      %114 = vector.load %arg7[%113, %c0_55, %c0_56] : memref<30x32x32xbf16, #tpu.memory_space<vmem>>, vector<1x32x32xbf16>
      %115 = vector.shape_cast %114 : vector<1x32x32xbf16> to vector<32x32xbf16>
      %cst_57 = arith.constant dense<0.000000e+00> : vector<8x32xf32>
      %116 = tpu.matmul %112, %115, %cst_57 {dimension_numbers = #tpu.dot_dimension_numbers<[1], [0], [0], [1], [0, 0, 1, 1], [], []>} : vector<8x32xbf16>, vector<32x32xbf16>, vector<8x32xf32> -> vector<8x32xf32>
      %117 = arith.index_cast %95 : i32 to index
      %c0_58 = arith.constant 0 : index
      %118 = vector.load %arg8[%117, %c0_58] : memref<30x32xf32, #tpu.memory_space<vmem>>, vector<1x32xf32>
      %119 = vector.shape_cast %118 : vector<1x32xf32> to vector<32xf32>
      %120 = vector.shape_cast %119 : vector<32xf32> to vector<1x32xf32>
      %121 = vector.broadcast %120 : vector<1x32xf32> to vector<8x32xf32>
      %122 = arith.addf %116, %121 : vector<8x32xf32>
      %c4_i32 = arith.constant 4 : i32
      %123 = arith.addi %35, %c4_i32 : i32
      %124 = arith.truncf %122 : vector<8x32xf32> to vector<8x32xbf16>
      %cst_59 = arith.constant dense<0.000000e+00> : vector<16x32xf32>
      %125 = tpu.matmul %1, %124, %cst_59 {dimension_numbers = #tpu.dot_dimension_numbers<[1], [0], [0], [1], [0, 0, 1, 1], [], []>} : vector<16x8xbf16>, vector<8x32xbf16>, vector<16x32xf32> -> vector<16x32xf32>
      %126 = arith.truncf %125 : vector<16x32xf32> to vector<16x32xbf16>
      %127 = arith.index_cast %123 : i32 to index
      %c0_60 = arith.constant 0 : index
      %c0_61 = arith.constant 0 : index
      %128 = vector.load %arg5[%127, %c0_60, %c0_61] : memref<30x32x32xbf16, #tpu.memory_space<vmem>>, vector<1x32x32xbf16>
      %129 = vector.shape_cast %128 : vector<1x32x32xbf16> to vector<32x32xbf16>
      %cst_62 = arith.constant dense<0.000000e+00> : vector<16x32xf32>
      %130 = tpu.matmul %126, %129, %cst_62 {dimension_numbers = #tpu.dot_dimension_numbers<[1], [0], [0], [1], [0, 0, 1, 1], [], []>} : vector<16x32xbf16>, vector<32x32xbf16>, vector<16x32xf32> -> vector<16x32xf32>
      %131 = arith.index_cast %123 : i32 to index
      %c0_63 = arith.constant 0 : index
      %132 = vector.load %arg6[%131, %c0_63] : memref<30x32xf32, #tpu.memory_space<vmem>>, vector<1x32xf32>
      %133 = vector.shape_cast %132 : vector<1x32xf32> to vector<32xf32>
      %134 = vector.shape_cast %133 : vector<32xf32> to vector<1x32xf32>
      %135 = vector.broadcast %134 : vector<1x32xf32> to vector<16x32xf32>
      %136 = arith.addf %130, %135 : vector<16x32xf32>
      %cst_64 = arith.constant 0.000000e+00 : f32
      %137 = vector.broadcast %cst_64 : f32 to vector<16x32xf32>
      %138 = arith.cmpf ogt, %136, %137 : vector<16x32xf32>
      %cst_65 = arith.constant 0.00999999977 : f32
      %139 = vector.broadcast %cst_65 : f32 to vector<16x32xf32>
      %140 = arith.mulf %139, %136 : vector<16x32xf32>
      %141 = arith.select %138, %136, %140 : vector<16x32xi1>, vector<16x32xf32>
      %142 = arith.truncf %141 : vector<16x32xf32> to vector<16x32xbf16>
      %143 = arith.index_cast %123 : i32 to index
      %c0_66 = arith.constant 0 : index
      %c0_67 = arith.constant 0 : index
      %144 = vector.load %arg7[%143, %c0_66, %c0_67] : memref<30x32x32xbf16, #tpu.memory_space<vmem>>, vector<1x32x32xbf16>
      %145 = vector.shape_cast %144 : vector<1x32x32xbf16> to vector<32x32xbf16>
      %cst_68 = arith.constant dense<0.000000e+00> : vector<16x32xf32>
      %146 = tpu.matmul %142, %145, %cst_68 {dimension_numbers = #tpu.dot_dimension_numbers<[1], [0], [0], [1], [0, 0, 1, 1], [], []>} : vector<16x32xbf16>, vector<32x32xbf16>, vector<16x32xf32> -> vector<16x32xf32>
      %147 = arith.index_cast %123 : i32 to index
      %c0_69 = arith.constant 0 : index
      %148 = vector.load %arg8[%147, %c0_69] : memref<30x32xf32, #tpu.memory_space<vmem>>, vector<1x32xf32>
      %149 = vector.shape_cast %148 : vector<1x32xf32> to vector<32xf32>
      %150 = vector.shape_cast %149 : vector<32xf32> to vector<1x32xf32>
      %151 = vector.broadcast %150 : vector<1x32xf32> to vector<16x32xf32>
      %152 = arith.addf %146, %151 : vector<16x32xf32>
      %c3_i32 = arith.constant 3 : i32
      %153 = arith.addi %35, %c3_i32 : i32
      %154 = arith.truncf %arg15 : vector<16x32xf32> to vector<16x32xbf16>
      %155 = arith.index_cast %153 : i32 to index
      %c0_70 = arith.constant 0 : index
      %c0_71 = arith.constant 0 : index
      %156 = vector.load %arg5[%155, %c0_70, %c0_71] : memref<30x32x32xbf16, #tpu.memory_space<vmem>>, vector<1x32x32xbf16>
      %157 = vector.shape_cast %156 : vector<1x32x32xbf16> to vector<32x32xbf16>
      %cst_72 = arith.constant dense<0.000000e+00> : vector<16x32xf32>
      %158 = tpu.matmul %154, %157, %cst_72 {dimension_numbers = #tpu.dot_dimension_numbers<[1], [0], [0], [1], [0, 0, 1, 1], [], []>} : vector<16x32xbf16>, vector<32x32xbf16>, vector<16x32xf32> -> vector<16x32xf32>
      %159 = arith.index_cast %153 : i32 to index
      %c0_73 = arith.constant 0 : index
      %160 = vector.load %arg6[%159, %c0_73] : memref<30x32xf32, #tpu.memory_space<vmem>>, vector<1x32xf32>
      %161 = vector.shape_cast %160 : vector<1x32xf32> to vector<32xf32>
      %162 = vector.shape_cast %161 : vector<32xf32> to vector<1x32xf32>
      %163 = vector.broadcast %162 : vector<1x32xf32> to vector<16x32xf32>
      %164 = arith.addf %158, %163 : vector<16x32xf32>
      %cst_74 = arith.constant 0.000000e+00 : f32
      %165 = vector.broadcast %cst_74 : f32 to vector<16x32xf32>
      %166 = arith.cmpf ogt, %164, %165 : vector<16x32xf32>
      %cst_75 = arith.constant 0.00999999977 : f32
      %167 = vector.broadcast %cst_75 : f32 to vector<16x32xf32>
      %168 = arith.mulf %167, %164 : vector<16x32xf32>
      %169 = arith.select %166, %164, %168 : vector<16x32xi1>, vector<16x32xf32>
      %170 = arith.truncf %169 : vector<16x32xf32> to vector<16x32xbf16>
      %171 = arith.index_cast %153 : i32 to index
      %c0_76 = arith.constant 0 : index
      %c0_77 = arith.constant 0 : index
      %172 = vector.load %arg7[%171, %c0_76, %c0_77] : memref<30x32x32xbf16, #tpu.memory_space<vmem>>, vector<1x32x32xbf16>
      %173 = vector.shape_cast %172 : vector<1x32x32xbf16> to vector<32x32xbf16>
      %cst_78 = arith.constant dense<0.000000e+00> : vector<16x32xf32>
      %174 = tpu.matmul %170, %173, %cst_78 {dimension_numbers = #tpu.dot_dimension_numbers<[1], [0], [0], [1], [0, 0, 1, 1], [], []>} : vector<16x32xbf16>, vector<32x32xbf16>, vector<16x32xf32> -> vector<16x32xf32>
      %175 = arith.index_cast %153 : i32 to index
      %c0_79 = arith.constant 0 : index
      %176 = vector.load %arg8[%175, %c0_79] : memref<30x32xf32, #tpu.memory_space<vmem>>, vector<1x32xf32>
      %177 = vector.shape_cast %176 : vector<1x32xf32> to vector<32xf32>
      %178 = vector.shape_cast %177 : vector<32xf32> to vector<1x32xf32>
      %179 = vector.broadcast %178 : vector<1x32xf32> to vector<16x32xf32>
      %180 = arith.addf %174, %179 : vector<16x32xf32>
      %181 = arith.addf %180, %152 : vector<16x32xf32>
      %c5_i32_80 = arith.constant 5 : i32
      %182 = arith.addi %35, %c5_i32_80 : i32
      %183 = arith.truncf %181 : vector<16x32xf32> to vector<16x32xbf16>
      %184 = arith.index_cast %182 : i32 to index
      %c0_81 = arith.constant 0 : index
      %c0_82 = arith.constant 0 : index
      %185 = vector.load %arg5[%184, %c0_81, %c0_82] : memref<30x32x32xbf16, #tpu.memory_space<vmem>>, vector<1x32x32xbf16>
      %186 = vector.shape_cast %185 : vector<1x32x32xbf16> to vector<32x32xbf16>
      %cst_83 = arith.constant dense<0.000000e+00> : vector<16x32xf32>
      %187 = tpu.matmul %183, %186, %cst_83 {dimension_numbers = #tpu.dot_dimension_numbers<[1], [0], [0], [1], [0, 0, 1, 1], [], []>} : vector<16x32xbf16>, vector<32x32xbf16>, vector<16x32xf32> -> vector<16x32xf32>
      %188 = arith.index_cast %182 : i32 to index
      %c0_84 = arith.constant 0 : index
      %189 = vector.load %arg6[%188, %c0_84] : memref<30x32xf32, #tpu.memory_space<vmem>>, vector<1x32xf32>
      %190 = vector.shape_cast %189 : vector<1x32xf32> to vector<32xf32>
      %191 = vector.shape_cast %190 : vector<32xf32> to vector<1x32xf32>
      %192 = vector.broadcast %191 : vector<1x32xf32> to vector<16x32xf32>
      %193 = arith.addf %187, %192 : vector<16x32xf32>
      %cst_85 = arith.constant 0.000000e+00 : f32
      %194 = vector.broadcast %cst_85 : f32 to vector<16x32xf32>
      %195 = arith.cmpf ogt, %193, %194 : vector<16x32xf32>
      %cst_86 = arith.constant 0.00999999977 : f32
      %196 = vector.broadcast %cst_86 : f32 to vector<16x32xf32>
      %197 = arith.mulf %196, %193 : vector<16x32xf32>
      %198 = arith.select %195, %193, %197 : vector<16x32xi1>, vector<16x32xf32>
      %199 = arith.truncf %198 : vector<16x32xf32> to vector<16x32xbf16>
      %200 = arith.index_cast %182 : i32 to index
      %c0_87 = arith.constant 0 : index
      %c0_88 = arith.constant 0 : index
      %201 = vector.load %arg7[%200, %c0_87, %c0_88] : memref<30x32x32xbf16, #tpu.memory_space<vmem>>, vector<1x32x32xbf16>
      %202 = vector.shape_cast %201 : vector<1x32x32xbf16> to vector<32x32xbf16>
      %cst_89 = arith.constant dense<0.000000e+00> : vector<16x32xf32>
      %203 = tpu.matmul %199, %202, %cst_89 {dimension_numbers = #tpu.dot_dimension_numbers<[1], [0], [0], [1], [0, 0, 1, 1], [], []>} : vector<16x32xbf16>, vector<32x32xbf16>, vector<16x32xf32> -> vector<16x32xf32>
      %204 = arith.index_cast %182 : i32 to index
      %c0_90 = arith.constant 0 : index
      %205 = vector.load %arg8[%204, %c0_90] : memref<30x32xf32, #tpu.memory_space<vmem>>, vector<1x32xf32>
      %206 = vector.shape_cast %205 : vector<1x32xf32> to vector<32xf32>
      %207 = vector.shape_cast %206 : vector<32xf32> to vector<1x32xf32>
      %208 = vector.broadcast %207 : vector<1x32xf32> to vector<16x32xf32>
      %209 = arith.addf %203, %208 : vector<16x32xf32>
      scf.yield %209, %122 : vector<16x32xf32>, vector<8x32xf32>
    }
    %c5_i32_9 = arith.constant 5 : i32
    %12 = arith.truncf %11#0 : vector<16x32xf32> to vector<16x32xbf16>
    %c0_10 = arith.constant 0 : index
    %c0_11 = arith.constant 0 : index
    %13 = vector.load %arg9[%c0_10, %c0_11] : memref<32x64xbf16, #tpu.memory_space<vmem>>, vector<32x64xbf16>
    %cst_12 = arith.constant dense<0.000000e+00> : vector<16x64xf32>
    %14 = tpu.matmul %12, %13, %cst_12 {dimension_numbers = #tpu.dot_dimension_numbers<[1], [0], [0], [1], [0, 0, 1, 1], [], []>} : vector<16x32xbf16>, vector<32x64xbf16>, vector<16x64xf32> -> vector<16x64xf32>
    %c0_13 = arith.constant 0 : index
    %c0_14 = arith.constant 0 : index
    %15 = vector.load %arg10[%c0_13, %c0_14] : memref<1x64xf32, #tpu.memory_space<vmem>>, vector<1x64xf32>
    %16 = vector.broadcast %15 : vector<1x64xf32> to vector<16x64xf32>
    %17 = arith.addf %14, %16 : vector<16x64xf32>
    %cst_15 = arith.constant 0.000000e+00 : f32
    %18 = vector.broadcast %cst_15 : f32 to vector<16x64xf32>
    %19 = arith.cmpf ogt, %17, %18 : vector<16x64xf32>
    %cst_16 = arith.constant 0.00999999977 : f32
    %20 = vector.broadcast %cst_16 : f32 to vector<16x64xf32>
    %21 = arith.mulf %20, %17 : vector<16x64xf32>
    %22 = arith.select %19, %17, %21 : vector<16x64xi1>, vector<16x64xf32>
    %23 = arith.truncf %22 : vector<16x64xf32> to vector<16x64xbf16>
    %c0_17 = arith.constant 0 : index
    %c0_18 = arith.constant 0 : index
    %24 = vector.load %arg11[%c0_17, %c0_18] : memref<64x2xbf16, #tpu.memory_space<vmem>>, vector<64x2xbf16>
    %cst_19 = arith.constant dense<0.000000e+00> : vector<16x2xf32>
    %25 = tpu.matmul %23, %24, %cst_19 {dimension_numbers = #tpu.dot_dimension_numbers<[1], [0], [0], [1], [0, 0, 1, 1], [], []>} : vector<16x64xbf16>, vector<64x2xbf16>, vector<16x2xf32> -> vector<16x2xf32>
    %c0_20 = arith.constant 0 : index
    %c0_21 = arith.constant 0 : index
    %26 = vector.load %arg12[%c0_20, %c0_21] : memref<1x2xf32, #tpu.memory_space<vmem>>, vector<1x2xf32>
    %27 = vector.broadcast %26 : vector<1x2xf32> to vector<16x2xf32>
    %28 = arith.addf %25, %27 : vector<16x2xf32>
    %cst_22 = arith.constant 0.000000e+00 : f32
    %29 = vector.broadcast %cst_22 : f32 to vector<16x2xf32>
    %30 = arith.cmpf ogt, %28, %29 : vector<16x2xf32>
    %cst_23 = arith.constant 0.00999999977 : f32
    %31 = vector.broadcast %cst_23 : f32 to vector<16x2xf32>
    %32 = arith.mulf %31, %28 : vector<16x2xf32>
    %33 = arith.select %30, %28, %32 : vector<16x2xi1>, vector<16x2xf32>
    %c0_24 = arith.constant 0 : index
    %c0_25 = arith.constant 0 : index
    %34 = vector.load %arg13[%c0_24, %c0_25] : memref<16x2xf32, #tpu.memory_space<vmem>>, vector<16x2xf32>
    tpu.vector_store %arg13[%c0_24, %c0_25], %33 {strides = array<i32>} : memref<16x2xf32, #tpu.memory_space<vmem>>, vector<16x2xf32>,
    return
  }
}

</mosaic_0001>

<llo_original>
// kernel: gcn_forward.1
$region0: #{gcn_forward.1}
  #allocation0 [shape = 'u32[]', space=smem, size = 0x4, offset = 0x4, fixed_abs, tag = 'smem constant byte address 0x4 - core index']
  #allocation1 [shape = 'u32[72,128]{1,0:T(1,128)}', space=vmem, size = 0x9000, scoped, tag = 'internal scratch']
  %s0 = inlined_call_operand.vmem [shape: bf16[8,16], index: 0, kind: input, shape index: {}]
  %s1 = inlined_call_operand.vmem [shape: bf16[16,8], index: 1, kind: input, shape index: {}]
  %s2 = inlined_call_operand.vmem [shape: bf16[24,4], index: 2, kind: input, shape index: {}]
  %s3 = inlined_call_operand.vmem [shape: bf16[4,32], index: 3, kind: input, shape index: {}]
  %s4 = inlined_call_operand.vmem [shape: f32[1,32], index: 4, kind: input, shape index: {}]
  %s5 = inlined_call_operand.vmem [shape: bf16[30,32,32], index: 5, kind: input, shape index: {}]
  %s6 = inlined_call_operand.vmem [shape: f32[30,32], index: 6, kind: input, shape index: {}]
  %s7 = inlined_call_operand.vmem [shape: bf16[30,32,32], index: 7, kind: input, shape index: {}]
  %s8 = inlined_call_operand.vmem [shape: f32[30,32], index: 8, kind: input, shape index: {}]
  %s9 = inlined_call_operand.vmem [shape: bf16[32,64], index: 9, kind: input, shape index: {}]
  %s10 = inlined_call_operand.vmem [shape: f32[1,64], index: 10, kind: input, shape index: {}]
  %s11 = inlined_call_operand.vmem [shape: bf16[64,2], index: 11, kind: input, shape index: {}]
  %s12 = inlined_call_operand.vmem [shape: f32[1,2], index: 12, kind: input, shape index: {}]
  %s13 = inlined_call_operand.vmem [shape: f32[16,2], index: 13, kind: output, shape index: {}]
  %s14 = sld [smem:[#allocation0]]
  $region69: #{gcn_forward.1} parent=0
    _
  %s16 = ssub.s32 1, %s14
  %s17 = scalar_select 0, %s16, %s14
  // Predicated region
  $region2: #{gcn_forward.1} parent=0 // pred_check
    _
  $region3: #{gcn_forward.1} parent=0 // pred_check_branch
    %19 = sbr.rel (0) target = $region5
  $region4: #{gcn_forward.1} parent=0 // pred_region
    _
  $region5: #{gcn_forward.1} parent=0 // pred_fallthru
    _
  // Predicated region
  $region6: #{gcn_forward.1} parent=0 // pred_check
    _
  $region7: #{gcn_forward.1} parent=0 // pred_check_branch
    %21 = sbr.rel (0) target = $region9
  $region8: #{gcn_forward.1} parent=0 // pred_region
    _
  $region9: #{gcn_forward.1} parent=0 // pred_fallthru
    _
  // Predicated region
  $region10: #{gcn_forward.1} parent=0 // pred_check
    _
  $region11: #{gcn_forward.1} parent=0 // pred_check_branch
    %23 = sbr.rel (0) target = $region13
  $region12: #{gcn_forward.1} parent=0 // pred_region
    _
  $region13: #{gcn_forward.1} parent=0 // pred_fallthru
    _
  // Predicated region
  $region14: #{gcn_forward.1} parent=0 // pred_check
    _
  $region15: #{gcn_forward.1} parent=0 // pred_check_branch
    %25 = sbr.rel (0) target = $region17
  $region16: #{gcn_forward.1} parent=0 // pred_region
    _
  $region17: #{gcn_forward.1} parent=0 // pred_fallthru
    _
  // Predicated region
  $region18: #{gcn_forward.1} parent=0 // pred_check
    _
  $region19: #{gcn_forward.1} parent=0 // pred_check_branch
    %27 = sbr.rel (0) target = $region21
  $region20: #{gcn_forward.1} parent=0 // pred_region
    _
  $region21: #{gcn_forward.1} parent=0 // pred_fallthru
    _
  // Predicated region
  $region22: #{gcn_forward.1} parent=0 // pred_check
    _
  $region23: #{gcn_forward.1} parent=0 // pred_check_branch
    %29 = sbr.rel (0) target = $region25
  $region24: #{gcn_forward.1} parent=0 // pred_region
    _
  $region25: #{gcn_forward.1} parent=0 // pred_fallthru
    _
  // Predicated region
  $region26: #{gcn_forward.1} parent=0 // pred_check
    _
  $region27: #{gcn_forward.1} parent=0 // pred_check_branch
    %31 = sbr.rel (0) target = $region29
  $region28: #{gcn_forward.1} parent=0 // pred_region
    _
  $region29: #{gcn_forward.1} parent=0 // pred_fallthru
    _
  // Predicated region
  $region30: #{gcn_forward.1} parent=0 // pred_check
    _
  $region31: #{gcn_forward.1} parent=0 // pred_check_branch
    %33 = sbr.rel (0) target = $region33
  $region32: #{gcn_forward.1} parent=0 // pred_region
    _
  $region33: #{gcn_forward.1} parent=0 // pred_fallthru
    _
  // Predicated region
  $region34: #{gcn_forward.1} parent=0 // pred_check
    _
  $region35: #{gcn_forward.1} parent=0 // pred_check_branch
    %35 = sbr.rel (0) target = $region37
  $region36: #{gcn_forward.1} parent=0 // pred_region
    _
  $region37: #{gcn_forward.1} parent=0 // pred_fallthru
    _
  // Predicated region
  $region38: #{gcn_forward.1} parent=0 // pred_check
    _
  $region39: #{gcn_forward.1} parent=0 // pred_check_branch
    %37 = sbr.rel (0) target = $region41
  $region40: #{gcn_forward.1} parent=0 // pred_region
    _
  $region41: #{gcn_forward.1} parent=0 // pred_fallthru
    _
  // Predicated region
  $region42: #{gcn_forward.1} parent=0 // pred_check
    _
  $region43: #{gcn_forward.1} parent=0 // pred_check_branch
    %39 = sbr.rel (0) target = $region45
  $region44: #{gcn_forward.1} parent=0 // pred_region
    _
  $region45: #{gcn_forward.1} parent=0 // pred_fallthru
    _
  // Predicated region
  $region46: #{gcn_forward.1} parent=0 // pred_check
    _
  $region47: #{gcn_forward.1} parent=0 // pred_check_branch
    %41 = sbr.rel (0) target = $region49
  $region48: #{gcn_forward.1} parent=0 // pred_region
    _
  $region49: #{gcn_forward.1} parent=0 // pred_fallthru
    _
  // Predicated region
  $region50: #{gcn_forward.1} parent=0 // pred_check
    _
  $region51: #{gcn_forward.1} parent=0 // pred_check_branch
    %43 = sbr.rel (0) target = $region53
  $region52: #{gcn_forward.1} parent=0 // pred_region
    _
  $region53: #{gcn_forward.1} parent=0 // pred_fallthru
    _
  %v45 = vld [vmem:[%s0] sm:$0xf]
  %v46 = vld [vmem:[%s1] sm:$0xf]
  %v47 = vld [vmem:[%s1 + $0x4] sm:$0xf]
  %v48 = vld [vmem:[%s2] sm:$0xf]
  %v49 = vld [vmem:[%s2 + $0x4] sm:$0xf]
  %v50 = vld [vmem:[%s2 + $0x8] sm:$0xf]
  %v51 = vld [vmem:[%s3] sm:$0x3]
  %v52 = vld [vmem:[%s4] sm:$0x1]
  %v54 = vperm.slane %v52, 0
  %v59 = vunpack.c.l.b16 %v48
  %v60 = vunpack.c.l.b16 %v49
  %v61 = vunpack.c.l.b16 %v50
  %v62 = vpack.c.b16 %v60, %v59
  %v63 = vpack.c.b16 %v61, %v61
  %vm64 = vcmask 31744
  %v66 = vsel %vm64, %v62, 0
  %v69 = vsel %vm64, %v63, 0
  %vm71 = vcmask 1041408
  %v73 = vsel %vm71, %v51, 0
  %75 = vmatpush.bf16.msra.mxu0 0
  %76 = vmatpush.bf16.msra.mxu0 0
  %77 = vmatpush.bf16.msra.mxu0 0
  %78 = vmatpush.bf16.msra.mxu0 0
  %79 = vmatpush.bf16.msra.mxu0 0
  %80 = vmatpush.bf16.msra.mxu0 0
  %81 = vmatpush.bf16.msra.mxu0 0
  %82 = vmatpush.bf16.msra.mxu0 %v73
  %83 = vmatmul.bf16.gmra.mxu0 %v66
  %v84 = vpop.f32.mrf.mxu0
  %v85 = vadd.f32 %v54, %v84
  %v86 = vpop.f32.mrf.mxu0
  %v87 = vadd.f32 %v54, %v86
  %88 = vmatmul.bf16.gmra.mxu0 %v69
  %v89 = vpop.f32.mrf.mxu0
  %v90 = vadd.f32 %v54, %v89
  %v91 = vpop.f32.mrf.mxu0
  %92 = vdwg.mxu0
  loop: start=0, step=1, limit=5
  $region54: #{gcn_forward.1} parent=0 // loop_pre_header
    _
  $region55: #{gcn_forward.1} parent=0 // loop_header
    %s94 = sphi 0, %s98
    %p95 = scmp.ge.s32.totalorder %s94, 5
    %v99 = vphi %v85, %v648
    %v100 = vphi %v87, %v650
    %v101 = vphi %v90, %v362
  $region56: #{gcn_forward.1} parent=0 // loop_header_branch
    %97 = sbr.rel (%p95) target = $region60
  $region57: #{gcn_forward.1} parent=0 // loop_body
    %s102 = smul.u32 %s94, 6
    %v103 = vpack.c.bf16 %v100, %v99
    %vm104 = vcmask 130048
    %v106 = vsel %vm104, %v45, 0
    %108 = vmatpush.bf16.msra.mxu0 0
    %109 = vmatpush.bf16.msra.mxu0 0
    %110 = vmatpush.bf16.msra.mxu0 0
    %111 = vmatpush.bf16.msra.mxu0 0
    %112 = vmatpush.bf16.msra.mxu0 0
    %113 = vmatpush.bf16.msra.mxu0 0
    %114 = vmatpush.bf16.msra.mxu0 0
    %115 = vmatpush.bf16.msra.mxu0 %v103
    %116 = vmatmul.bf16.gmra.mxu0 %v106
    %v117 = vpop.f32.mrf.mxu0
    %v118 = vadd.f32 0.0, %v117
    %v119 = vpop.f32.mrf.mxu0
    %120 = vdwg.mxu0
    %v121 = vpack.c.bf16 %v118, %v118
    %s122 = smul.u32 %s102, 4
    %s123 = smul.addr %s122, 4
    %s124 = scalar_lea.vmem %s5, %s123
    %v125 = vld [vmem:[%s124] sm:$0xf]
    %v126 = vld [vmem:[%s124 + $0x4] sm:$0xf]
    %v127 = vld [vmem:[%s124 + $0x8] sm:$0xf]
    %v128 = vld [vmem:[%s124 + $0xc] sm:$0xf]
    %s129 = scalar_lea.vmem %s6, %s102
    %v130 = vld [vmem:[%s129] sm:$0x1]
    %v131 = vperm.slane %v130, 0
    %v136 = vunpack.c.l.b16 %v125
    %v137 = vunpack.c.l.b16 %v126
    %v138 = vunpack.c.l.b16 %v127
    %v139 = vunpack.c.l.b16 %v128
    %v140 = vpack.c.b16 %v137, %v136
    %v141 = vpack.c.b16 %v139, %v138
    %vm144 = vcmask 261120
    %v146 = vsel %vm144, %v121, 0
    %148 = vmatpush.bf16.msra.mxu0 0
    %149 = vmatpush.bf16.msra.mxu0 0
    %150 = vmatpush.bf16.msra.mxu0 0
    %151 = vmatpush.bf16.msra.mxu0 0
    %152 = vmatpush.bf16.msra.mxu0 0
    %153 = vmatpush.bf16.msra.mxu0 0
    %154 = vmatpush.bf16.msra.mxu0 %v141
    %155 = vmatpush.bf16.msra.mxu0 %v140
    %156 = vmatmul.bf16.gmra.mxu0 %v146
    %v157 = vpop.f32.mrf.mxu0
    %v158 = vadd.f32 %v131, %v157
    %v159 = vpop.f32.mrf.mxu0
    %160 = vdwg.mxu0
    %vm161 = vcmp.gt.f32.partialorder %v158, 0.0
    %v162 = vmul.f32 %v158, 0.01
    %v163 = vsel %vm161, %v158, %v162
    %v164 = vpack.c.bf16 %v163, %v163
    %s165 = smul.addr %s122, 4
    %s166 = scalar_lea.vmem %s7, %s165
    %v167 = vld [vmem:[%s166] sm:$0xf]
    %v168 = vld [vmem:[%s166 + $0x4] sm:$0xf]
    %v169 = vld [vmem:[%s166 + $0x8] sm:$0xf]
    %v170 = vld [vmem:[%s166 + $0xc] sm:$0xf]
    %s171 = scalar_lea.vmem %s8, %s102
    %v172 = vld [vmem:[%s171] sm:$0x1]
    %v173 = vperm.slane %v172, 0
    %v178 = vunpack.c.l.b16 %v167
    %v179 = vunpack.c.l.b16 %v168
    %v180 = vunpack.c.l.b16 %v169
    %v181 = vunpack.c.l.b16 %v170
    %v182 = vpack.c.b16 %v179, %v178
    %v183 = vpack.c.b16 %v181, %v180
    %v187 = vsel %vm144, %v164, 0
    %189 = vmatpush.bf16.msra.mxu0 0
    %190 = vmatpush.bf16.msra.mxu0 0
    %191 = vmatpush.bf16.msra.mxu0 0
    %192 = vmatpush.bf16.msra.mxu0 0
    %193 = vmatpush.bf16.msra.mxu0 0
    %194 = vmatpush.bf16.msra.mxu0 0
    %195 = vmatpush.bf16.msra.mxu0 %v183
    %196 = vmatpush.bf16.msra.mxu0 %v182
    %197 = vmatmul.bf16.gmra.mxu0 %v187
    %v198 = vpop.f32.mrf.mxu0
    %v199 = vadd.f32 %v173, %v198
    %v200 = vpop.f32.mrf.mxu0
    %201 = vdwg.mxu0
    %s202 = sadd.s32 %s102, 1
    %v203 = vpack.c.bf16 %v101, %v101
    %s204 = smul.u32 %s202, 4
    %s205 = smul.addr %s204, 4
    %s206 = scalar_lea.vmem %s5, %s205
    %v207 = vld [vmem:[%s206] sm:$0xf]
    %v208 = vld [vmem:[%s206 + $0x4] sm:$0xf]
    %v209 = vld [vmem:[%s206 + $0x8] sm:$0xf]
    %v210 = vld [vmem:[%s206 + $0xc] sm:$0xf]
    %s211 = scalar_lea.vmem %s6, %s202
    %v212 = vld [vmem:[%s211] sm:$0x1]
    %v213 = vperm.slane %v212, 0
    %v218 = vunpack.c.l.b16 %v207
    %v219 = vunpack.c.l.b16 %v208
    %v220 = vunpack.c.l.b16 %v209
    %v221 = vunpack.c.l.b16 %v210
    %v222 = vpack.c.b16 %v219, %v218
    %v223 = vpack.c.b16 %v221, %v220
    %v227 = vsel %vm144, %v203, 0
    %229 = vmatpush.bf16.msra.mxu0 0
    %230 = vmatpush.bf16.msra.mxu0 0
    %231 = vmatpush.bf16.msra.mxu0 0
    %232 = vmatpush.bf16.msra.mxu0 0
    %233 = vmatpush.bf16.msra.mxu0 0
    %234 = vmatpush.bf16.msra.mxu0 0
    %235 = vmatpush.bf16.msra.mxu0 %v223
    %236 = vmatpush.bf16.msra.mxu0 %v222
    %237 = vmatmul.bf16.gmra.mxu0 %v227
    %v238 = vpop.f32.mrf.mxu0
    %v239 = vadd.f32 %v213, %v238
    %v240 = vpop.f32.mrf.mxu0
    %241 = vdwg.mxu0
    %vm242 = vcmp.gt.f32.partialorder %v239, 0.0
    %v243 = vmul.f32 %v239, 0.01
    %v244 = vsel %vm242, %v239, %v243
    %v245 = vpack.c.bf16 %v244, %v244
    %s246 = smul.addr %s204, 4
    %s247 = scalar_lea.vmem %s7, %s246
    %v248 = vld [vmem:[%s247] sm:$0xf]
    %v249 = vld [vmem:[%s247 + $0x4] sm:$0xf]
    %v250 = vld [vmem:[%s247 + $0x8] sm:$0xf]
    %v251 = vld [vmem:[%s247 + $0xc] sm:$0xf]
    %s252 = scalar_lea.vmem %s8, %s202
    %v253 = vld [vmem:[%s252] sm:$0x1]
    %v254 = vperm.slane %v253, 0
    %v259 = vunpack.c.l.b16 %v248
    %v260 = vunpack.c.l.b16 %v249
    %v261 = vunpack.c.l.b16 %v250
    %v262 = vunpack.c.l.b16 %v251
    %v263 = vpack.c.b16 %v260, %v259
    %v264 = vpack.c.b16 %v262, %v261
    %v268 = vsel %vm144, %v245, 0
    %270 = vmatpush.bf16.msra.mxu0 0
    %271 = vmatpush.bf16.msra.mxu0 0
    %272 = vmatpush.bf16.msra.mxu0 0
    %273 = vmatpush.bf16.msra.mxu0 0
    %274 = vmatpush.bf16.msra.mxu0 0
    %275 = vmatpush.bf16.msra.mxu0 0
    %276 = vmatpush.bf16.msra.mxu0 %v264
    %277 = vmatpush.bf16.msra.mxu0 %v263
    %278 = vmatmul.bf16.gmra.mxu0 %v268
    %v279 = vpop.f32.mrf.mxu0
    %v280 = vadd.f32 %v254, %v279
    %v281 = vpop.f32.mrf.mxu0
    %282 = vdwg.mxu0
    %v283 = vadd.f32 %v280, %v199
    %s284 = sadd.s32 %s102, 2
    %v285 = vpack.c.bf16 %v283, %v283
    %s286 = smul.u32 %s284, 4
    %s287 = smul.addr %s286, 4
    %s288 = scalar_lea.vmem %s5, %s287
    %v289 = vld [vmem:[%s288] sm:$0xf]
    %v290 = vld [vmem:[%s288 + $0x4] sm:$0xf]
    %v291 = vld [vmem:[%s288 + $0x8] sm:$0xf]
    %v292 = vld [vmem:[%s288 + $0xc] sm:$0xf]
    %s293 = scalar_lea.vmem %s6, %s284
    %v294 = vld [vmem:[%s293] sm:$0x1]
    %v295 = vperm.slane %v294, 0
    %v300 = vunpack.c.l.b16 %v289
    %v301 = vunpack.c.l.b16 %v290
    %v302 = vunpack.c.l.b16 %v291
    %v303 = vunpack.c.l.b16 %v292
    %v304 = vpack.c.b16 %v301, %v300
    %v305 = vpack.c.b16 %v303, %v302
    %v309 = vsel %vm144, %v285, 0
    %311 = vmatpush.bf16.msra.mxu0 0
    %312 = vmatpush.bf16.msra.mxu0 0
    %313 = vmatpush.bf16.msra.mxu0 0
    %314 = vmatpush.bf16.msra.mxu0 0
    %315 = vmatpush.bf16.msra.mxu0 0
    %316 = vmatpush.bf16.msra.mxu0 0
    %317 = vmatpush.bf16.msra.mxu0 %v305
    %318 = vmatpush.bf16.msra.mxu0 %v304
    %319 = vmatmul.bf16.gmra.mxu0 %v309
    %v320 = vpop.f32.mrf.mxu0
    %v321 = vadd.f32 %v295, %v320
    %v322 = vpop.f32.mrf.mxu0
    %323 = vdwg.mxu0
    %vm324 = vcmp.gt.f32.partialorder %v321, 0.0
    %v325 = vmul.f32 %v321, 0.01
    %v326 = vsel %vm324, %v321, %v325
    %v327 = vpack.c.bf16 %v326, %v326
    %s328 = smul.addr %s286, 4
    %s329 = scalar_lea.vmem %s7, %s328
    %v330 = vld [vmem:[%s329] sm:$0xf]
    %v331 = vld [vmem:[%s329 + $0x4] sm:$0xf]
    %v332 = vld [vmem:[%s329 + $0x8] sm:$0xf]
    %v333 = vld [vmem:[%s329 + $0xc] sm:$0xf]
    %s334 = scalar_lea.vmem %s8, %s284
    %v335 = vld [vmem:[%s334] sm:$0x1]
    %v336 = vperm.slane %v335, 0
    %v341 = vunpack.c.l.b16 %v330
    %v342 = vunpack.c.l.b16 %v331
    %v343 = vunpack.c.l.b16 %v332
    %v344 = vunpack.c.l.b16 %v333
    %v345 = vpack.c.b16 %v342, %v341
    %v346 = vpack.c.b16 %v344, %v343
    %v350 = vsel %vm144, %v327, 0
    %352 = vmatpush.bf16.msra.mxu0 0
    %353 = vmatpush.bf16.msra.mxu0 0
    %354 = vmatpush.bf16.msra.mxu0 0
    %355 = vmatpush.bf16.msra.mxu0 0
    %356 = vmatpush.bf16.msra.mxu0 0
    %357 = vmatpush.bf16.msra.mxu0 0
    %358 = vmatpush.bf16.msra.mxu0 %v346
    %359 = vmatpush.bf16.msra.mxu0 %v345
    %360 = vmatmul.bf16.gmra.mxu0 %v350
    %v361 = vpop.f32.mrf.mxu0
    %v362 = vadd.f32 %v336, %v361
    %v363 = vpop.f32.mrf.mxu0
    %364 = vdwg.mxu0
    %s365 = sadd.s32 %s102, 4
    %v366 = vpack.c.bf16 %v362, %v362
    %v369 = vunpack.c.l.b16 %v46
    %v370 = vunpack.c.l.b16 %v47
    %v371 = vpack.c.b16 %v370, %v369
    %vm372 = vcmask 64512
    %v374 = vsel %vm372, %v371, 0
    %vm376 = vcmask 1043456
    %v378 = vsel %vm376, %v366, 0
    %380 = vmatpush.bf16.msra.mxu0 0
    %381 = vmatpush.bf16.msra.mxu0 0
    %382 = vmatpush.bf16.msra.mxu0 0
    %383 = vmatpush.bf16.msra.mxu0 0
    %384 = vmatpush.bf16.msra.mxu0 0
    %385 = vmatpush.bf16.msra.mxu0 0
    %386 = vmatpush.bf16.msra.mxu0 0
    %387 = vmatpush.bf16.msra.mxu0 %v378
    %388 = vmatmul.bf16.gmra.mxu0 %v374
    %v389 = vpop.f32.mrf.mxu0
    %v390 = vadd.f32 0.0, %v389
    %v391 = vpop.f32.mrf.mxu0
    %v392 = vadd.f32 0.0, %v391
    %393 = vdwg.mxu0
    %v394 = vpack.c.bf16 %v392, %v390
    %s395 = smul.u32 %s365, 4
    %s396 = smul.addr %s395, 4
    %s397 = scalar_lea.vmem %s5, %s396
    %v398 = vld [vmem:[%s397] sm:$0xf]
    %v399 = vld [vmem:[%s397 + $0x4] sm:$0xf]
    %v400 = vld [vmem:[%s397 + $0x8] sm:$0xf]
    %v401 = vld [vmem:[%s397 + $0xc] sm:$0xf]
    %s402 = scalar_lea.vmem %s6, %s365
    %v403 = vld [vmem:[%s402] sm:$0x1]
    %v404 = vperm.slane %v403, 0
    %v409 = vunpack.c.l.b16 %v398
    %v410 = vunpack.c.l.b16 %v399
    %v411 = vunpack.c.l.b16 %v400
    %v412 = vunpack.c.l.b16 %v401
    %v413 = vpack.c.b16 %v410, %v409
    %v414 = vpack.c.b16 %v412, %v411
    %v418 = vsel %vm144, %v394, 0
    %420 = vmatpush.bf16.msra.mxu0 0
    %421 = vmatpush.bf16.msra.mxu0 0
    %422 = vmatpush.bf16.msra.mxu0 0
    %423 = vmatpush.bf16.msra.mxu0 0
    %424 = vmatpush.bf16.msra.mxu0 0
    %425 = vmatpush.bf16.msra.mxu0 0
    %426 = vmatpush.bf16.msra.mxu0 %v414
    %427 = vmatpush.bf16.msra.mxu0 %v413
    %428 = vmatmul.bf16.gmra.mxu0 %v418
    %v429 = vpop.f32.mrf.mxu0
    %v430 = vadd.f32 %v404, %v429
    %v431 = vpop.f32.mrf.mxu0
    %v432 = vadd.f32 %v404, %v431
    %433 = vdwg.mxu0
    %vm434 = vcmp.gt.f32.partialorder %v430, 0.0
    %vm435 = vcmp.gt.f32.partialorder %v432, 0.0
    %v436 = vmul.f32 %v430, 0.01
    %v437 = vmul.f32 %v432, 0.01
    %v438 = vsel %vm434, %v430, %v436
    %v439 = vsel %vm435, %v432, %v437
    %v440 = vpack.c.bf16 %v439, %v438
    %s441 = smul.addr %s395, 4
    %s442 = scalar_lea.vmem %s7, %s441
    %v443 = vld [vmem:[%s442] sm:$0xf]
    %v444 = vld [vmem:[%s442 + $0x4] sm:$0xf]
    %v445 = vld [vmem:[%s442 + $0x8] sm:$0xf]
    %v446 = vld [vmem:[%s442 + $0xc] sm:$0xf]
    %s447 = scalar_lea.vmem %s8, %s365
    %v448 = vld [vmem:[%s447] sm:$0x1]
    %v449 = vperm.slane %v448, 0
    %v454 = vunpack.c.l.b16 %v443
    %v455 = vunpack.c.l.b16 %v444
    %v456 = vunpack.c.l.b16 %v445
    %v457 = vunpack.c.l.b16 %v446
    %v458 = vpack.c.b16 %v455, %v454
    %v459 = vpack.c.b16 %v457, %v456
    %v463 = vsel %vm144, %v440, 0
    %465 = vmatpush.bf16.msra.mxu0 0
    %466 = vmatpush.bf16.msra.mxu0 0
    %467 = vmatpush.bf16.msra.mxu0 0
    %468 = vmatpush.bf16.msra.mxu0 0
    %469 = vmatpush.bf16.msra.mxu0 0
    %470 = vmatpush.bf16.msra.mxu0 0
    %471 = vmatpush.bf16.msra.mxu0 %v459
    %472 = vmatpush.bf16.msra.mxu0 %v458
    %473 = vmatmul.bf16.gmra.mxu0 %v463
    %v474 = vpop.f32.mrf.mxu0
    %v475 = vadd.f32 %v449, %v474
    %v476 = vpop.f32.mrf.mxu0
    %v477 = vadd.f32 %v449, %v476
    %478 = vdwg.mxu0
    %s479 = sadd.s32 %s102, 3
    %s480 = smul.u32 %s479, 4
    %s481 = smul.addr %s480, 4
    %s482 = scalar_lea.vmem %s5, %s481
    %v483 = vld [vmem:[%s482] sm:$0xf]
    %v484 = vld [vmem:[%s482 + $0x4] sm:$0xf]
    %v485 = vld [vmem:[%s482 + $0x8] sm:$0xf]
    %v486 = vld [vmem:[%s482 + $0xc] sm:$0xf]
    %s487 = scalar_lea.vmem %s6, %s479
    %v488 = vld [vmem:[%s487] sm:$0x1]
    %v489 = vperm.slane %v488, 0
    %v494 = vunpack.c.l.b16 %v483
    %v495 = vunpack.c.l.b16 %v484
    %v496 = vunpack.c.l.b16 %v485
    %v497 = vunpack.c.l.b16 %v486
    %v498 = vpack.c.b16 %v495, %v494
    %v499 = vpack.c.b16 %v497, %v496
    %v503 = vsel %vm144, %v103, 0
    %505 = vmatpush.bf16.msra.mxu0 0
    %506 = vmatpush.bf16.msra.mxu0 0
    %507 = vmatpush.bf16.msra.mxu0 0
    %508 = vmatpush.bf16.msra.mxu0 0
    %509 = vmatpush.bf16.msra.mxu0 0
    %510 = vmatpush.bf16.msra.mxu0 0
    %511 = vmatpush.bf16.msra.mxu0 %v499
    %512 = vmatpush.bf16.msra.mxu0 %v498
    %513 = vmatmul.bf16.gmra.mxu0 %v503
    %v514 = vpop.f32.mrf.mxu0
    %v515 = vadd.f32 %v489, %v514
    %v516 = vpop.f32.mrf.mxu0
    %v517 = vadd.f32 %v489, %v516
    %518 = vdwg.mxu0
    %vm519 = vcmp.gt.f32.partialorder %v515, 0.0
    %vm520 = vcmp.gt.f32.partialorder %v517, 0.0
    %v521 = vmul.f32 %v515, 0.01
    %v522 = vmul.f32 %v517, 0.01
    %v523 = vsel %vm519, %v515, %v521
    %v524 = vsel %vm520, %v517, %v522
    %v525 = vpack.c.bf16 %v524, %v523
    %s526 = smul.addr %s480, 4
    %s527 = scalar_lea.vmem %s7, %s526
    %v528 = vld [vmem:[%s527] sm:$0xf]
    %v529 = vld [vmem:[%s527 + $0x4] sm:$0xf]
    %v530 = vld [vmem:[%s527 + $0x8] sm:$0xf]
    %v531 = vld [vmem:[%s527 + $0xc] sm:$0xf]
    %s532 = scalar_lea.vmem %s8, %s479
    %v533 = vld [vmem:[%s532] sm:$0x1]
    %v534 = vperm.slane %v533, 0
    %v539 = vunpack.c.l.b16 %v528
    %v540 = vunpack.c.l.b16 %v529
    %v541 = vunpack.c.l.b16 %v530
    %v542 = vunpack.c.l.b16 %v531
    %v543 = vpack.c.b16 %v540, %v539
    %v544 = vpack.c.b16 %v542, %v541
    %v548 = vsel %vm144, %v525, 0
    %550 = vmatpush.bf16.msra.mxu0 0
    %551 = vmatpush.bf16.msra.mxu0 0
    %552 = vmatpush.bf16.msra.mxu0 0
    %553 = vmatpush.bf16.msra.mxu0 0
    %554 = vmatpush.bf16.msra.mxu0 0
    %555 = vmatpush.bf16.msra.mxu0 0
    %556 = vmatpush.bf16.msra.mxu0 %v544
    %557 = vmatpush.bf16.msra.mxu0 %v543
    %558 = vmatmul.bf16.gmra.mxu0 %v548
    %v559 = vpop.f32.mrf.mxu0
    %v560 = vadd.f32 %v534, %v559
    %v561 = vpop.f32.mrf.mxu0
    %v562 = vadd.f32 %v534, %v561
    %563 = vdwg.mxu0
    %v564 = vadd.f32 %v560, %v475
    %v565 = vadd.f32 %v562, %v477
    %s566 = sadd.s32 %s102, 5
    %v567 = vpack.c.bf16 %v565, %v564
    %s568 = smul.u32 %s566, 4
    %s569 = smul.addr %s568, 4
    %s570 = scalar_lea.vmem %s5, %s569
    %v571 = vld [vmem:[%s570] sm:$0xf]
    %v572 = vld [vmem:[%s570 + $0x4] sm:$0xf]
    %v573 = vld [vmem:[%s570 + $0x8] sm:$0xf]
    %v574 = vld [vmem:[%s570 + $0xc] sm:$0xf]
    %s575 = scalar_lea.vmem %s6, %s566
    %v576 = vld [vmem:[%s575] sm:$0x1]
    %v577 = vperm.slane %v576, 0
    %v582 = vunpack.c.l.b16 %v571
    %v583 = vunpack.c.l.b16 %v572
    %v584 = vunpack.c.l.b16 %v573
    %v585 = vunpack.c.l.b16 %v574
    %v586 = vpack.c.b16 %v583, %v582
    %v587 = vpack.c.b16 %v585, %v584
    %v591 = vsel %vm144, %v567, 0
    %593 = vmatpush.bf16.msra.mxu0 0
    %594 = vmatpush.bf16.msra.mxu0 0
    %595 = vmatpush.bf16.msra.mxu0 0
    %596 = vmatpush.bf16.msra.mxu0 0
    %597 = vmatpush.bf16.msra.mxu0 0
    %598 = vmatpush.bf16.msra.mxu0 0
    %599 = vmatpush.bf16.msra.mxu0 %v587
    %600 = vmatpush.bf16.msra.mxu0 %v586
    %601 = vmatmul.bf16.gmra.mxu0 %v591
    %v602 = vpop.f32.mrf.mxu0
    %v603 = vadd.f32 %v577, %v602
    %v604 = vpop.f32.mrf.mxu0
    %v605 = vadd.f32 %v577, %v604
    %606 = vdwg.mxu0
    %vm607 = vcmp.gt.f32.partialorder %v603, 0.0
    %vm608 = vcmp.gt.f32.partialorder %v605, 0.0
    %v609 = vmul.f32 %v603, 0.01
    %v610 = vmul.f32 %v605, 0.01
    %v611 = vsel %vm607, %v603, %v609
    %v612 = vsel %vm608, %v605, %v610
    %v613 = vpack.c.bf16 %v612, %v611
    %s614 = smul.addr %s568, 4
    %s615 = scalar_lea.vmem %s7, %s614
    %v616 = vld [vmem:[%s615] sm:$0xf]
    %v617 = vld [vmem:[%s615 + $0x4] sm:$0xf]
    %v618 = vld [vmem:[%s615 + $0x8] sm:$0xf]
    %v619 = vld [vmem:[%s615 + $0xc] sm:$0xf]
    %s620 = scalar_lea.vmem %s8, %s566
    %v621 = vld [vmem:[%s620] sm:$0x1]
    %v622 = vperm.slane %v621, 0
    %v627 = vunpack.c.l.b16 %v616
    %v628 = vunpack.c.l.b16 %v617
    %v629 = vunpack.c.l.b16 %v618
    %v630 = vunpack.c.l.b16 %v619
    %v631 = vpack.c.b16 %v628, %v627
    %v632 = vpack.c.b16 %v630, %v629
    %v636 = vsel %vm144, %v613, 0
    %638 = vmatpush.bf16.msra.mxu0 0
    %639 = vmatpush.bf16.msra.mxu0 0
    %640 = vmatpush.bf16.msra.mxu0 0
    %641 = vmatpush.bf16.msra.mxu0 0
    %642 = vmatpush.bf16.msra.mxu0 0
    %643 = vmatpush.bf16.msra.mxu0 0
    %644 = vmatpush.bf16.msra.mxu0 %v632
    %645 = vmatpush.bf16.msra.mxu0 %v631
    %646 = vmatmul.bf16.gmra.mxu0 %v636
    %v647 = vpop.f32.mrf.mxu0
    %v648 = vadd.f32 %v622, %v647
    %v649 = vpop.f32.mrf.mxu0
    %v650 = vadd.f32 %v622, %v649
    %651 = vdwg.mxu0
  $region58: #{gcn_forward.1} parent=0 // loop_footer
    %s98 = sadd.s32 1, %s94
  $region59: #{gcn_forward.1} parent=0 // loop_footer_branch
    %93 = sbr.rel target = $region55
  $region60: #{gcn_forward.1} parent=0 // loop_exit
    _
  %v652 = vpack.c.bf16 %v100, %v99
  %v653 = vld [vmem:[%s9] sm:$0xf]
  %v654 = vld [vmem:[%s9 + $0x4] sm:$0xf]
  %v655 = vld [vmem:[%s9 + $0x8] sm:$0xf]
  %v656 = vld [vmem:[%s9 + $0xc] sm:$0xf]
  %v657 = vld [vmem:[%s10] sm:$0x1]
  %v659 = vperm.slane %v657, 0
  %v665 = vunpack.c.l.b16 %v653
  %v666 = vunpack.c.l.b16 %v654
  %v667 = vunpack.c.l.b16 %v655
  %v668 = vunpack.c.l.b16 %v656
  %v669 = vpack.c.b16 %v666, %v665
  %v670 = vpack.c.b16 %v668, %v667
  %vm673 = vcmask 261120
  %v675 = vsel %vm673, %v652, 0
  %677 = vmatpush.bf16.msra.mxu0 0
  %678 = vmatpush.bf16.msra.mxu0 0
  %679 = vmatpush.bf16.msra.mxu0 0
  %680 = vmatpush.bf16.msra.mxu0 0
  %681 = vmatpush.bf16.msra.mxu0 0
  %682 = vmatpush.bf16.msra.mxu0 0
  %683 = vmatpush.bf16.msra.mxu0 %v670
  %684 = vmatpush.bf16.msra.mxu0 %v669
  %685 = vmatmul.bf16.gmra.mxu0 %v675
  %v686 = vpop.f32.mrf.mxu0
  %v687 = vadd.f32 %v659, %v686
  %v688 = vpop.f32.mrf.mxu0
  %v689 = vadd.f32 %v659, %v688
  %690 = vdwg.mxu0
  %vm691 = vcmp.gt.f32.partialorder %v687, 0.0
  %vm692 = vcmp.gt.f32.partialorder %v689, 0.0
  %v693 = vmul.f32 %v687, 0.01
  %v694 = vmul.f32 %v689, 0.01
  %v695 = vsel %vm691, %v687, %v693
  %v696 = vsel %vm692, %v689, %v694
  %v697 = vpack.c.bf16 %v696, %v695
  %v698 = vld [vmem:[%s11] sm:$0xf]
  %v699 = vld [vmem:[%s11 + $0x4] sm:$0xf]
  %v700 = vld [vmem:[%s11 + $0x8] sm:$0xf]
  %v701 = vld [vmem:[%s11 + $0xc] sm:$0xf]
  %v702 = vld [vmem:[%s11 + $0x10] sm:$0xf]
  %v703 = vld [vmem:[%s11 + $0x14] sm:$0xf]
  %v704 = vld [vmem:[%s11 + $0x18] sm:$0xf]
  %v705 = vld [vmem:[%s11 + $0x1c] sm:$0xf]
  %v706 = vld [vmem:[%s12] sm:$0x1]
  %v708 = vperm.slane %v706, 0
  %v718 = vunpack.c.l.b16 %v698
  %v719 = vunpack.c.l.b16 %v699
  %v720 = vunpack.c.l.b16 %v700
  %v721 = vunpack.c.l.b16 %v701
  %v722 = vunpack.c.l.b16 %v702
  %v723 = vunpack.c.l.b16 %v703
  %v724 = vunpack.c.l.b16 %v704
  %v725 = vunpack.c.l.b16 %v705
  %v726 = vpack.c.b16 %v719, %v718
  %v727 = vpack.c.b16 %v721, %v720
  %v728 = vpack.c.b16 %v723, %v722
  %v729 = vpack.c.b16 %v725, %v724
  %vm734 = vcmask 523264
  %v736 = vsel %vm734, %v697, 0
  %738 = vmatpush.bf16.msra.mxu0 0
  %739 = vmatpush.bf16.msra.mxu0 0
  %740 = vmatpush.bf16.msra.mxu0 0
  %741 = vmatpush.bf16.msra.mxu0 0
  %742 = vmatpush.bf16.msra.mxu0 %v729
  %743 = vmatpush.bf16.msra.mxu0 %v728
  %744 = vmatpush.bf16.msra.mxu0 %v727
  %745 = vmatpush.bf16.msra.mxu0 %v726
  %746 = vmatmul.bf16.gmra.mxu0 %v736
  %v747 = vpop.f32.mrf.mxu0
  %v748 = vadd.f32 %v708, %v747
  %v749 = vpop.f32.mrf.mxu0
  %v750 = vadd.f32 %v708, %v749
  %751 = vdwg.mxu0
  %vm752 = vcmp.gt.f32.partialorder %v748, 0.0
  %vm753 = vcmp.gt.f32.partialorder %v750, 0.0
  %v754 = vmul.f32 %v748, 0.01
  %v755 = vmul.f32 %v750, 0.01
  %v756 = vsel %vm752, %v748, %v754
  %v757 = vsel %vm753, %v750, %v755
  %vm758 = vcmask 15360
  %759 = vst.msk [vmem:[%s13] sm:$0xff] %vm758, %v756
  %760 = vst.msk [vmem:[%s13 + $0x8] sm:$0xff] %vm758, %v757
  // Predicated region
  $region61: #{gcn_forward.1} parent=0 // pred_check
    _
  $region62: #{gcn_forward.1} parent=0 // pred_check_branch
    %762 = sbr.rel (0) target = $region64
  $region63: #{gcn_forward.1} parent=0 // pred_region
    _
  $region64: #{gcn_forward.1} parent=0 // pred_fallthru
    _
  // Predicated region
  $region65: #{gcn_forward.1} parent=0 // pred_check
    _
  $region66: #{gcn_forward.1} parent=0 // pred_check_branch
    %764 = sbr.rel (0) target = $region68
  $region67: #{gcn_forward.1} parent=0 // pred_region
    _
  $region68: #{gcn_forward.1} parent=0 // pred_fallthru
    _

</llo_original>
